<compile_context>
chip_gen: v7x
topology: tpu7x:2x2x1
jax: 0.10.0
libtpu: 0.0.40
codegen_flags: <defaults>
</compile_context>

<pallas_src>
import jax
import jax.numpy as jnp
from jax.experimental import pallas as pl
from jax.experimental.pallas import tpu as pltpu

LANE = 128                      # lane width; MLP head dims padded to this
VMEM_LIMIT = 48 * 1024 * 1024   # fits v7x (64 MiB physical) with headroom
BF16 = jnp.bfloat16


def _pad2d(a, rows, cols):
    r, c = a.shape
    return jnp.pad(a, ((0, rows - r), (0, cols - c)))


def _mlp_head(h, bf, w1, b1, w2, b2, w3, b3):
    """Fused epilogue: + bf, tanh, then 3-layer MLP (bf16 MXU, f32 accum)."""
    h = jnp.tanh(h + bf)
    h = jnp.tanh(jnp.dot(h.astype(BF16), w1,
                         preferred_element_type=jnp.float32) + b1)
    h = jnp.tanh(jnp.dot(h.astype(BF16), w2,
                         preferred_element_type=jnp.float32) + b2)
    return jnp.dot(h.astype(BF16), w3,
                   preferred_element_type=jnp.float32) + b3


# ---------------------------------------------------------------------------
# Pass 1: hW = tanh(x @ M + bs) @ Wf       (M = gene_adj @ Ws folded outside)
#   x arrives f32 and is cast to bf16 in-kernel (no separate XLA cast pass).
# ---------------------------------------------------------------------------
def _prep_kernel(x_ref, m_ref, bs_ref, wf_ref, hw_ref):
    h = jnp.dot(x_ref[...].astype(BF16), m_ref[...],
                preferred_element_type=jnp.float32)
    h = jnp.tanh(h + bs_ref[...])
    hw_ref[...] = jnp.dot(h.astype(BF16), wf_ref[...],
                          preferred_element_type=jnp.float32).astype(BF16)


# ---------------------------------------------------------------------------
# Pass 2, path A (resident hW): grid over row tiles only, full hW in VMEM.
#   adj arrives f32 (row strip) and is cast to bf16 in-kernel.
# ---------------------------------------------------------------------------
def _fw_mlp_resident_kernel(adj_ref, hw_ref, bf_ref,
                            w1_ref, b1_ref, w2_ref, b2_ref, w3_ref, b3_ref,
                            out_ref):
    acc = jnp.dot(adj_ref[...].astype(BF16), hw_ref[...],
                  preferred_element_type=jnp.float32)
    out_ref[...] = _mlp_head(acc, bf_ref[...],
                             w1_ref[...], b1_ref[...],
                             w2_ref[...], b2_ref[...],
                             w3_ref[...], b3_ref[...])


# ---------------------------------------------------------------------------
# Pass 2, path B (k-tiled): classic (i, k) accumulator matmul for large n.
#   k==0 writes the partial product directly (no zero-init + "+=").
# ---------------------------------------------------------------------------
def _fw_mlp_ktiled_kernel(adj_ref, hw_ref, bf_ref,
                          w1_ref, b1_ref, w2_ref, b2_ref, w3_ref, b3_ref,
                          out_ref, acc_ref):
    k = pl.program_id(1)
    partial = jnp.dot(adj_ref[...].astype(BF16), hw_ref[...],
                      preferred_element_type=jnp.float32)

    @pl.when(k == 0)
    def _():
        acc_ref[...] = partial

    @pl.when(k != 0)
    def _():
        acc_ref[...] += partial

    @pl.when(k == pl.num_programs(1) - 1)
    def _():
        out_ref[...] = _mlp_head(acc_ref[...], bf_ref[...],
                                 w1_ref[...], b1_ref[...],
                                 w2_ref[...], b2_ref[...],
                                 w3_ref[...], b3_ref[...])


def _resident_hw_fits(n, f, tm):
    """Conservative VMEM estimate for the resident-hW pass-2 path."""
    adj_strip = 2 * tm * n * 4            # double-buffered f32 adj row strip
    hw_resident = 2 * n * f * 2           # bf16 hW (assume 2 buffers)
    out_buf = 2 * tm * LANE * 4           # f32 padded output tile
    head = 2 * (f * LANE + 2 * LANE * LANE) * 2 + 8 * LANE * 4
    return (adj_strip + hw_resident + out_buf + head + (2 << 20)
            <= int(VMEM_LIMIT * 0.85))


def higcn_forward(x, adj, gene_adj, params, *,
                  tm=512, tk=512, tm_prep=2048, resident_hw=None):
    """higcn forward. resident_hw: None = auto, True/False = force path."""
    n, f = x.shape
    nclass = params["w3"].shape[1]
    assert nclass <= LANE
    tm = min(tm, n)
    tk = min(tk, n)
    tm_prep = min(tm_prep, n)
    # Note: on v7x keep n // tm >= 2 (and even) so the parallel row axis can
    # be sharded across both TensorCores.
    assert n % tm == 0 and n % tk == 0 and n % tm_prep == 0, \
        "N_cells must be divisible by tm / tk / tm_prep"

    # Fold: (x @ gene_adj) @ Ws == x @ (gene_adj @ Ws).  M is small (f x f).
    m_b = jnp.dot(gene_adj, params["ws"]).astype(BF16)
    wf_b = params["wf"].astype(BF16)

    # Lane-dense (zero-padded) MLP head, weights pre-cast to bf16.
    w1p = _pad2d(params["w1"], f, LANE).astype(BF16)
    b1p = _pad2d(params["b1"], 1, LANE)
    w2p = _pad2d(params["w2"], LANE, LANE).astype(BF16)
    b2p = _pad2d(params["b2"], 1, LANE)
    w3p = _pad2d(params["w3"], LANE, LANE).astype(BF16)
    b3p = _pad2d(params["b3"], 1, LANE)

    # ---- pass 1: materialize hW once (large row tiles, x cast in-kernel) ---
    prep_cost = pl.CostEstimate(
        flops=4 * n * f * f,
        transcendentals=n * f,
        bytes_accessed=4 * n * f + 2 * n * f + 3 * 2 * f * f)
    hw = pl.pallas_call(
        _prep_kernel,
        out_shape=jax.ShapeDtypeStruct((n, f), BF16),
        grid_spec=pltpu.PrefetchScalarGridSpec(
            num_scalar_prefetch=0,
            grid=(n // tm_prep,),
            in_specs=[
                pl.BlockSpec((tm_prep, f), lambda i: (i, 0)),   # x tile (f32)
                pl.BlockSpec((f, f), lambda i: (0, 0)),         # M (resident)
                pl.BlockSpec((1, f), lambda i: (0, 0)),         # bs
                pl.BlockSpec((f, f), lambda i: (0, 0)),         # Wf
            ],
            out_specs=pl.BlockSpec((tm_prep, f), lambda i: (i, 0)),
        ),
        compiler_params=pltpu.CompilerParams(
            dimension_semantics=("parallel",),
            vmem_limit_bytes=VMEM_LIMIT),
        cost_estimate=prep_cost,
    )(x, m_b, params["bs"], wf_b)

    if resident_hw is None:
        resident_hw = _resident_hw_fits(n, f, tm)

    head_flops = 2 * n * (f * LANE + 2 * LANE * LANE)
    head_trans = n * (f + 2 * LANE)

    if resident_hw:
        # ---- pass 2 / path A: resident hW, single row-tile grid axis -------
        fw_cost = pl.CostEstimate(
            flops=2 * n * n * f + head_flops,
            transcendentals=head_trans,
            bytes_accessed=4 * n * n + 2 * n * f + 4 * n * LANE)
        out_pad = pl.pallas_call(
            _fw_mlp_resident_kernel,
            out_shape=jax.ShapeDtypeStruct((n, LANE), jnp.float32),
            grid_spec=pltpu.PrefetchScalarGridSpec(
                num_scalar_prefetch=0,
                grid=(n // tm,),
                in_specs=[
                    pl.BlockSpec((tm, n), lambda i: (i, 0)),      # adj strip (f32)
                    pl.BlockSpec((n, f), lambda i: (0, 0)),       # hW resident
                    pl.BlockSpec((1, f), lambda i: (0, 0)),       # bf
                    pl.BlockSpec((f, LANE), lambda i: (0, 0)),    # w1 (padded)
                    pl.BlockSpec((1, LANE), lambda i: (0, 0)),    # b1
                    pl.BlockSpec((LANE, LANE), lambda i: (0, 0)), # w2
                    pl.BlockSpec((1, LANE), lambda i: (0, 0)),    # b2
                    pl.BlockSpec((LANE, LANE), lambda i: (0, 0)), # w3
                    pl.BlockSpec((1, LANE), lambda i: (0, 0)),    # b3
                ],
                out_specs=pl.BlockSpec((tm, LANE), lambda i: (i, 0)),
            ),
            compiler_params=pltpu.CompilerParams(
                dimension_semantics=("parallel",),
                vmem_limit_bytes=VMEM_LIMIT),
            cost_estimate=fw_cost,
        )(adj, hw, params["bf"], w1p, b1p, w2p, b2p, w3p, b3p)
    else:
        # ---- pass 2 / path B: (i, k) accumulator matmul for large n --------
        fw_cost = pl.CostEstimate(
            flops=2 * n * n * f + head_flops,
            transcendentals=head_trans,
            bytes_accessed=4 * n * n + 2 * (n // tm) * n * f + 4 * n * LANE)
        out_pad = pl.pallas_call(
            _fw_mlp_ktiled_kernel,
            out_shape=jax.ShapeDtypeStruct((n, LANE), jnp.float32),
            grid_spec=pltpu.PrefetchScalarGridSpec(
                num_scalar_prefetch=0,
                grid=(n // tm, n // tk),
                in_specs=[
                    pl.BlockSpec((tm, tk), lambda i, k: (i, k)),      # adj (f32)
                    pl.BlockSpec((tk, f), lambda i, k: (k, 0)),       # hW tile
                    pl.BlockSpec((1, f), lambda i, k: (0, 0)),        # bf
                    pl.BlockSpec((f, LANE), lambda i, k: (0, 0)),     # w1
                    pl.BlockSpec((1, LANE), lambda i, k: (0, 0)),     # b1
                    pl.BlockSpec((LANE, LANE), lambda i, k: (0, 0)),  # w2
                    pl.BlockSpec((1, LANE), lambda i, k: (0, 0)),     # b2
                    pl.BlockSpec((LANE, LANE), lambda i, k: (0, 0)),  # w3
                    pl.BlockSpec((1, LANE), lambda i, k: (0, 0)),     # b3
                ],
                out_specs=pl.BlockSpec((tm, LANE), lambda i, k: (i, 0)),
                scratch_shapes=[pltpu.VMEM((tm, f), jnp.float32)],
            ),
            compiler_params=pltpu.CompilerParams(
                dimension_semantics=("parallel", "arbitrary"),
                vmem_limit_bytes=VMEM_LIMIT),
            cost_estimate=fw_cost,
        )(adj, hw, params["bf"], w1p, b1p, w2p, b2p, w3p, b3p)

    return out_pad[:, :nclass]


def init_params(key, nfeat, nclass):
    """Deterministic synthetic parameters (shapes follow higcn.__init__)."""
    ks = jax.random.split(key, 10)

    def w(k, shape):
        return jax.random.normal(k, shape, jnp.float32) * 0.1

    return {
        # sparsegcn(nfeat, nfeat)
        "ws": w(ks[0], (nfeat, nfeat)),
        "bs": w(ks[1], (1, nfeat)),
        # fwgcn(nfeat, nfeat)
        "wf": w(ks[2], (nfeat, nfeat)),
        "bf": w(ks[3], (1, nfeat)),
        # linear1: nfeat -> 64
        "w1": w(ks[4], (nfeat, 64)),
        "b1": w(ks[5], (1, 64)),
        # linear2: 64 -> 16
        "w2": w(ks[6], (64, 16)),
        "b2": w(ks[7], (1, 16)),
        # linear3: 16 -> nclass
        "w3": w(ks[8], (16, nclass)),
        "b3": w(ks[9], (1, nclass)),
    }


def reference_forward(x, adj, gene_adj, p):
    """Pure-JAX f32 reference for correctness check."""
    h = jnp.tanh((x @ gene_adj) @ p["ws"] + p["bs"])
    h = jnp.tanh(adj @ (h @ p["wf"]) + p["bf"])
    h = jnp.tanh(h @ p["w1"] + p["b1"])
    h = jnp.tanh(h @ p["w2"] + p["b2"])
    return h @ p["w3"] + p["b3"]


if __name__ == "__main__":
    n_cells, nfeat, nclass = 256, 128, 4

    key = jax.random.PRNGKey(0)
    k_x, k_adj, k_gadj, k_par = jax.random.split(key, 4)

    x = jax.random.normal(k_x, (n_cells, nfeat), jnp.float32)
    # symmetric, row-normalized-ish adjacencies (dense; synthetic)
    adj_raw = jnp.abs(jax.random.normal(k_adj, (n_cells, n_cells), jnp.float32))
    adj = (adj_raw + adj_raw.T) / (2.0 * n_cells)
    gadj_raw = jnp.abs(jax.random.normal(k_gadj, (nfeat, nfeat), jnp.float32))
    gene_adj = (gadj_raw + gadj_raw.T) / (2.0 * nfeat)

    params = init_params(k_par, nfeat, nclass)
    ref = reference_forward(x, adj, gene_adj, params)

    # Path A (resident hW): what auto-selection picks at this problem size.
    out_res = higcn_forward(x, adj, gene_adj, params,
                            tm=128, tm_prep=256, resident_hw=True)
    out_res = jax.block_until_ready(out_res)
    assert out_res.shape == (n_cells, nclass), out_res.shape
    err_res = float(jnp.max(jnp.abs(out_res - ref)))
    assert jnp.allclose(out_res, ref, atol=3e-2, rtol=3e-2), err_res

    # Path B (k-tiled accumulator): force it so the 2x2 grid / accumulation
    # path used for large n is also exercised and checked.
    out_kt = higcn_forward(x, adj, gene_adj, params,
                           tm=128, tk=128, tm_prep=128, resident_hw=False)
    out_kt = jax.block_until_ready(out_kt)
    assert out_kt.shape == (n_cells, nclass), out_kt.shape
    err_kt = float(jnp.max(jnp.abs(out_kt - ref)))
    assert jnp.allclose(out_kt, ref, atol=3e-2, rtol=3e-2), err_kt

    print("KERNEL_OK")
</pallas_src>

<mosaic_0001>
module attributes {stable_mosaic.version = 11 : i64} {
  func.func @_prep_kernel(%arg0: i32, %arg1: memref<256x128xf32, #tpu.memory_space<vmem>>, %arg2: memref<128x128xbf16, #tpu.memory_space<vmem>>, %arg3: memref<1x128xf32, #tpu.memory_space<vmem>>, %arg4: memref<128x128xbf16, #tpu.memory_space<vmem>>, %arg5: memref<256x128xbf16, #tpu.memory_space<vmem>>) attributes {dimension_semantics = [#tpu.dimension_semantics<parallel>], iteration_bounds = array<i64: 1>, scalar_prefetch = 0 : i64, scratch_operands = 0 : i64, tpu.core_type = #tpu.core_type<tc>, window_params = [{transform_indices = @transform_0, window_bounds = array<i64: 256, 128>}, {pipeline_mode = #tpu.pipeline_mode<synchronous>, transform_indices = @transform_1, window_bounds = array<i64: 128, 128>}, {pipeline_mode = #tpu.pipeline_mode<synchronous>, transform_indices = @transform_2, window_bounds = array<i64: 1, 128>}, {pipeline_mode = #tpu.pipeline_mode<synchronous>, transform_indices = @transform_3, window_bounds = array<i64: 128, 128>}, {transform_indices = @transform_4, window_bounds = array<i64: 256, 128>}]} {
    %c0 = arith.constant 0 : index
    %c0_0 = arith.constant 0 : index
    %0 = vector.load %arg1[%c0, %c0_0] : memref<256x128xf32, #tpu.memory_space<vmem>>, vector<256x128xf32>
    %1 = arith.truncf %0 : vector<256x128xf32> to vector<256x128xbf16>
    %c0_1 = arith.constant 0 : index
    %c0_2 = arith.constant 0 : index
    %2 = vector.load %arg2[%c0_1, %c0_2] : memref<128x128xbf16, #tpu.memory_space<vmem>>, vector<128x128xbf16>
    %cst = arith.constant dense<0.000000e+00> : vector<256x128xf32>
    %3 = tpu.matmul %1, %2, %cst {dimension_numbers = #tpu.dot_dimension_numbers<[1], [0], [0], [1], [0, 0, 1, 1], [], []>} : vector<256x128xbf16>, vector<128x128xbf16>, vector<256x128xf32> -> vector<256x128xf32>
    %c0_3 = arith.constant 0 : index
    %c0_4 = arith.constant 0 : index
    %4 = vector.load %arg3[%c0_3, %c0_4] : memref<1x128xf32, #tpu.memory_space<vmem>>, vector<1x128xf32>
    %5 = vector.broadcast %4 : vector<1x128xf32> to vector<256x128xf32>
    %6 = arith.addf %3, %5 : vector<256x128xf32>
    %7 = math.tanh %6 : vector<256x128xf32>
    %8 = arith.truncf %7 : vector<256x128xf32> to vector<256x128xbf16>
    %c0_5 = arith.constant 0 : index
    %c0_6 = arith.constant 0 : index
    %9 = vector.load %arg4[%c0_5, %c0_6] : memref<128x128xbf16, #tpu.memory_space<vmem>>, vector<128x128xbf16>
    %cst_7 = arith.constant dense<0.000000e+00> : vector<256x128xf32>
    %10 = tpu.matmul %8, %9, %cst_7 {dimension_numbers = #tpu.dot_dimension_numbers<[1], [0], [0], [1], [0, 0, 1, 1], [], []>} : vector<256x128xbf16>, vector<128x128xbf16>, vector<256x128xf32> -> vector<256x128xf32>
    %11 = arith.truncf %10 : vector<256x128xf32> to vector<256x128xbf16>
    %c0_8 = arith.constant 0 : index
    %c0_9 = arith.constant 0 : index
    %12 = vector.load %arg5[%c0_8, %c0_9] : memref<256x128xbf16, #tpu.memory_space<vmem>>, vector<256x128xbf16>
    tpu.vector_store %arg5[%c0_8, %c0_9], %11 {strides = array<i32>} : memref<256x128xbf16, #tpu.memory_space<vmem>>, vector<256x128xbf16>,
    return
  }
  func.func @transform_0(%arg0: i32) -> (i32, i32) {
    %c0_i32 = arith.constant 0 : i32
    %c0_i32_0 = arith.constant 0 : i32
    return %arg0, %c0_i32 : i32, i32
  }
  func.func @transform_1(%arg0: i32) -> (i32, i32) {
    %c0_i32 = arith.constant 0 : i32
    %c0_i32_0 = arith.constant 0 : i32
    %c0_i32_1 = arith.constant 0 : i32
    return %c0_i32, %c0_i32_0 : i32, i32
  }
  func.func @transform_2(%arg0: i32) -> (i32, i32) {
    %c0_i32 = arith.constant 0 : i32
    %c0_i32_0 = arith.constant 0 : i32
    %c0_i32_1 = arith.constant 0 : i32
    return %c0_i32, %c0_i32_0 : i32, i32
  }
  func.func @transform_3(%arg0: i32) -> (i32, i32) {
    %c0_i32 = arith.constant 0 : i32
    %c0_i32_0 = arith.constant 0 : i32
    %c0_i32_1 = arith.constant 0 : i32
    return %c0_i32, %c0_i32_0 : i32, i32
  }
  func.func @transform_4(%arg0: i32) -> (i32, i32) {
    %c0_i32 = arith.constant 0 : i32
    %c0_i32_0 = arith.constant 0 : i32
    return %arg0, %c0_i32 : i32, i32
  }
}

</mosaic_0001>

<llo_original>
// kernel: tpu_custom_call.1
$region0: #{tpu_custom_call.1}
  #allocation0 [shape = 'u32[]', space=smem, size = 0x4, offset = 0x4, fixed_abs, tag = 'smem constant byte address 0x4 - core index']
  #allocation1 [shape = 'u32[144,128]{1,0:T(1,128)}', space=vmem, size = 0x12000, scoped, tag = 'internal scratch']
  %s0 = inlined_call_operand.hbm [shape: f32[256,128], index: 0, kind: input, shape index: {}]
  %s1 = inlined_call_operand.hbm [shape: bf16[128,128], index: 1, kind: input, shape index: {}]
  %s2 = inlined_call_operand.vmem [shape: f32[1,128], index: 2, kind: input, shape index: {}]
  %s3 = inlined_call_operand.hbm [shape: bf16[128,128], index: 3, kind: input, shape index: {}]
  %s4 = inlined_call_operand.hbm [shape: bf16[256,128], index: 4, kind: output, shape index: {}]
  %s5 = sld [smem:[#allocation0]]
  $region38: #{tpu_custom_call.1} parent=0
    _
  %s7 = ssub.s32 1, %s5
  %s8 = scalar_select 0, %s7, %s5
  $region1: #{tpu_custom_call.1} parent=0
    #allocation2 [shape = 'u8[131072]{0}', space=vmem, size = 0x20000, scoped, tag = 'input window, operand 0, single buffered']
    #allocation3 [shape = 's32[1]{0}', space=sflag, size = 0x4, scoped, tag = 'scoped memory for tpu_custom_call.1']
    #allocation4 [shape = 's32[1]{0}', space=sflag, size = 0x4, scoped, tag = 'scoped memory for tpu_custom_call.1']
    #allocation5 [shape = 'u8[32768]{0}', space=vmem, size = 0x8000, scoped, tag = 'input window, operand 1, single buffered']
    #allocation6 [shape = 's32[1]{0}', space=sflag, size = 0x4, scoped, tag = 'scoped memory for tpu_custom_call.1']
    #allocation7 [shape = 'u8[32768]{0}', space=vmem, size = 0x8000, scoped, tag = 'input window, operand 3, single buffered']
    #allocation8 [shape = 'u8[65536]{0}', space=vmem, size = 0x10000, scoped, tag = 'output window, operand 0, single buffered']
    %9 = vsyncpa [#allocation3], 0
    %10 = vsyncpa [#allocation6], 0
    %11 = vsyncpa [#allocation4], 0
    // Predicated region
    $region2: #{tpu_custom_call.1} parent=1 // pred_check
      _
    $region3: #{tpu_custom_call.1} parent=1 // pred_check_branch
      %13 = sbr.rel (0) target = $region5
    $region4: #{tpu_custom_call.1} parent=1 // pred_region
      %s15 = ssub.s32 4096, 4096
      %16 = vsyncadd [#allocation3], %s15
      %s17 = sshll.u32 [#allocation2], 4
      %s18 = int_to_ptr.vmem [resolvable:$true] %s17
      %23 = dma.hbm_to_vmem [thread:$0]  %s0, 4096, %s18, [#allocation3], 128, 128, 8
    $region5: #{tpu_custom_call.1} parent=1 // pred_fallthru
      _
    // Predicated region
    $region6: #{tpu_custom_call.1} parent=1 // pred_check
      _
    $region7: #{tpu_custom_call.1} parent=1 // pred_check_branch
      %25 = sbr.rel (0) target = $region9
    $region8: #{tpu_custom_call.1} parent=1 // pred_region
      %s27 = ssub.s32 1024, 1024
      %28 = vsyncadd [#allocation6], %s27
      %s29 = sshll.u32 [#allocation5], 4
      %s30 = int_to_ptr.vmem [resolvable:$true] %s29
      %35 = dma.hbm_to_vmem [thread:$0]  %s1, 1024, %s30, [#allocation6], 64, 64, 4
    $region9: #{tpu_custom_call.1} parent=1 // pred_fallthru
      _
    // Predicated region
    $region10: #{tpu_custom_call.1} parent=1 // pred_check
      _
    $region11: #{tpu_custom_call.1} parent=1 // pred_check_branch
      %37 = sbr.rel (0) target = $region13
    $region12: #{tpu_custom_call.1} parent=1 // pred_region
      _
    $region13: #{tpu_custom_call.1} parent=1 // pred_fallthru
      _
    // Predicated region
    $region14: #{tpu_custom_call.1} parent=1 // pred_check
      _
    $region15: #{tpu_custom_call.1} parent=1 // pred_check_branch
      %39 = sbr.rel (0) target = $region17
    $region16: #{tpu_custom_call.1} parent=1 // pred_region
      %s41 = ssub.s32 1024, 1024
      %42 = vsyncadd [#allocation6], %s41
      %s43 = sshll.u32 [#allocation7], 4
      %s44 = int_to_ptr.vmem [resolvable:$true] %s43
      %49 = dma.hbm_to_vmem [thread:$0]  %s3, 1024, %s44, [#allocation6], 64, 64, 4
    $region17: #{tpu_custom_call.1} parent=1 // pred_fallthru
      _
    // Predicated region
    $region18: #{tpu_custom_call.1} parent=1 // pred_check
      _
    $region19: #{tpu_custom_call.1} parent=1 // pred_check_branch
      %51 = sbr.rel (0) target = $region21
    $region20: #{tpu_custom_call.1} parent=1 // pred_region
      %52 = dma.done [#allocation3], 4096
    $region21: #{tpu_custom_call.1} parent=1 // pred_fallthru
      _
    // Predicated region
    $region22: #{tpu_custom_call.1} parent=1 // pred_check
      _
    $region23: #{tpu_custom_call.1} parent=1 // pred_check_branch
      %54 = sbr.rel (0) target = $region25
    $region24: #{tpu_custom_call.1} parent=1 // pred_region
      %55 = dma.done [#allocation6], 1024
    $region25: #{tpu_custom_call.1} parent=1 // pred_fallthru
      _
    // Predicated region
    $region26: #{tpu_custom_call.1} parent=1 // pred_check
      _
    $region27: #{tpu_custom_call.1} parent=1 // pred_check_branch
      %57 = sbr.rel (0) target = $region29
    $region28: #{tpu_custom_call.1} parent=1 // pred_region
      %58 = dma.done [#allocation6], 1024
    $region29: #{tpu_custom_call.1} parent=1 // pred_fallthru
      _
    %v60 = vld [vmem:[#allocation2] sm:$0xff]
    %v61 = vld [vmem:[#allocation2 + $0x8] sm:$0xff]
    %v62 = vld [vmem:[#allocation2 + $0x10] sm:$0xff]
    %v63 = vld [vmem:[#allocation2 + $0x18] sm:$0xff]
    %v64 = vld [vmem:[#allocation2 + $0x20] sm:$0xff]
    %v65 = vld [vmem:[#allocation2 + $0x28] sm:$0xff]
    %v66 = vld [vmem:[#allocation2 + $0x30] sm:$0xff]
    %v67 = vld [vmem:[#allocation2 + $0x38] sm:$0xff]
    %v68 = vld [vmem:[#allocation2 + $0x40] sm:$0xff]
    %v69 = vld [vmem:[#allocation2 + $0x48] sm:$0xff]
    %v70 = vld [vmem:[#allocation2 + $0x50] sm:$0xff]
    %v71 = vld [vmem:[#allocation2 + $0x58] sm:$0xff]
    %v72 = vld [vmem:[#allocation2 + $0x60] sm:$0xff]
    %v73 = vld [vmem:[#allocation2 + $0x68] sm:$0xff]
    %v74 = vld [vmem:[#allocation2 + $0x70] sm:$0xff]
    %v75 = vld [vmem:[#allocation2 + $0x78] sm:$0xff]
    %v76 = vld [vmem:[#allocation2 + $0x80] sm:$0xff]
    %v77 = vld [vmem:[#allocation2 + $0x88] sm:$0xff]
    %v78 = vld [vmem:[#allocation2 + $0x90] sm:$0xff]
    %v79 = vld [vmem:[#allocation2 + $0x98] sm:$0xff]
    %v80 = vld [vmem:[#allocation2 + $0xa0] sm:$0xff]
    %v81 = vld [vmem:[#allocation2 + $0xa8] sm:$0xff]
    %v82 = vld [vmem:[#allocation2 + $0xb0] sm:$0xff]
    %v83 = vld [vmem:[#allocation2 + $0xb8] sm:$0xff]
    %v84 = vld [vmem:[#allocation2 + $0xc0] sm:$0xff]
    %v85 = vld [vmem:[#allocation2 + $0xc8] sm:$0xff]
    %v86 = vld [vmem:[#allocation2 + $0xd0] sm:$0xff]
    %v87 = vld [vmem:[#allocation2 + $0xd8] sm:$0xff]
    %v88 = vld [vmem:[#allocation2 + $0xe0] sm:$0xff]
    %v89 = vld [vmem:[#allocation2 + $0xe8] sm:$0xff]
    %v90 = vld [vmem:[#allocation2 + $0xf0] sm:$0xff]
    %v91 = vld [vmem:[#allocation2 + $0xf8] sm:$0xff]
    %v92 = vpack.c.bf16 %v61, %v60
    %v93 = vpack.c.bf16 %v63, %v62
    %v94 = vpack.c.bf16 %v65, %v64
    %v95 = vpack.c.bf16 %v67, %v66
    %v96 = vpack.c.bf16 %v69, %v68
    %v97 = vpack.c.bf16 %v71, %v70
    %v98 = vpack.c.bf16 %v73, %v72
    %v99 = vpack.c.bf16 %v75, %v74
    %v100 = vpack.c.bf16 %v77, %v76
    %v101 = vpack.c.bf16 %v79, %v78
    %v102 = vpack.c.bf16 %v81, %v80
    %v103 = vpack.c.bf16 %v83, %v82
    %v104 = vpack.c.bf16 %v85, %v84
    %v105 = vpack.c.bf16 %v87, %v86
    %v106 = vpack.c.bf16 %v89, %v88
    %v107 = vpack.c.bf16 %v91, %v90
    %v108 = vld [vmem:[#allocation5] sm:$0xf]
    %v109 = vld [vmem:[#allocation5 + $0x4] sm:$0xf]
    %v110 = vld [vmem:[#allocation5 + $0x8] sm:$0xf]
    %v111 = vld [vmem:[#allocation5 + $0xc] sm:$0xf]
    %v112 = vld [vmem:[#allocation5 + $0x10] sm:$0xf]
    %v113 = vld [vmem:[#allocation5 + $0x14] sm:$0xf]
    %v114 = vld [vmem:[#allocation5 + $0x18] sm:$0xf]
    %v115 = vld [vmem:[#allocation5 + $0x1c] sm:$0xf]
    %v116 = vld [vmem:[#allocation5 + $0x20] sm:$0xf]
    %v117 = vld [vmem:[#allocation5 + $0x24] sm:$0xf]
    %v118 = vld [vmem:[#allocation5 + $0x28] sm:$0xf]
    %v119 = vld [vmem:[#allocation5 + $0x2c] sm:$0xf]
    %v120 = vld [vmem:[#allocation5 + $0x30] sm:$0xf]
    %v121 = vld [vmem:[#allocation5 + $0x34] sm:$0xf]
    %v122 = vld [vmem:[#allocation5 + $0x38] sm:$0xf]
    %v123 = vld [vmem:[#allocation5 + $0x3c] sm:$0xf]
    %v124 = vld [vmem:[%s2] sm:$0x1]
    %v126 = vlaneseq
    %v127 = vshrl.u32 %v126, 7
    %v128 = vsub.s32 0, %v127
    %v129 = vrot.slane %v124, %v128
    %v147 = vunpack.c.l.b16 %v108
    %v148 = vunpack.c.l.b16 %v109
    %v149 = vunpack.c.l.b16 %v110
    %v150 = vunpack.c.l.b16 %v111
    %v151 = vunpack.c.l.b16 %v112
    %v152 = vunpack.c.l.b16 %v113
    %v153 = vunpack.c.l.b16 %v114
    %v154 = vunpack.c.l.b16 %v115
    %v155 = vunpack.c.l.b16 %v116
    %v156 = vunpack.c.l.b16 %v117
    %v157 = vunpack.c.l.b16 %v118
    %v158 = vunpack.c.l.b16 %v119
    %v159 = vunpack.c.l.b16 %v120
    %v160 = vunpack.c.l.b16 %v121
    %v161 = vunpack.c.l.b16 %v122
    %v162 = vunpack.c.l.b16 %v123
    %v163 = vpack.c.b16 %v148, %v147
    %v164 = vpack.c.b16 %v150, %v149
    %v165 = vpack.c.b16 %v152, %v151
    %v166 = vpack.c.b16 %v154, %v153
    %v167 = vpack.c.b16 %v156, %v155
    %v168 = vpack.c.b16 %v158, %v157
    %v169 = vpack.c.b16 %v160, %v159
    %v170 = vpack.c.b16 %v162, %v161
    %179 = vmatprep.subr.bf16.mxu0 0
    %180 = vmatpush1.bf16.msra.mxu0 %v163
    %181 = vmatprep.subr.bf16.mxu0 0
    %182 = vmatpush1.bf16.msra.mxu0 %v164
    %183 = vmatprep.subr.bf16.mxu0 0
    %184 = vmatpush1.bf16.msra.mxu0 %v165
    %185 = vmatprep.subr.bf16.mxu0 0
    %186 = vmatpush1.bf16.msra.mxu0 %v166
    %187 = vmatprep.subr.bf16.mxu0 0
    %188 = vmatpush1.bf16.msra.mxu0 %v167
    %189 = vmatprep.subr.bf16.mxu0 0
    %190 = vmatpush1.bf16.msra.mxu0 %v168
    %191 = vmatprep.subr.bf16.mxu0 0
    %192 = vmatpush1.bf16.msra.mxu0 %v169
    %193 = vmatprep.subr.bf16.mxu0 0
    %194 = vmatpush1.bf16.msra.mxu0 %v170
    %195 = vmatprep.subr.bf16.mxu0 0
    %196 = vmatpush1.bf16.msra.mxu0 0
    %197 = vmatprep.subr.bf16.mxu0 0
    %198 = vmatpush1.bf16.msra.mxu0 0
    %199 = vmatprep.subr.bf16.mxu0 0
    %200 = vmatpush1.bf16.msra.mxu0 0
    %201 = vmatprep.subr.bf16.mxu0 0
    %202 = vmatpush1.bf16.msra.mxu0 0
    %203 = vmatprep.subr.bf16.mxu0 0
    %204 = vmatpush1.bf16.msra.mxu0 0
    %205 = vmatprep.subr.bf16.mxu0 0
    %206 = vmatpush1.bf16.msra.mxu0 0
    %207 = vmatprep.subr.bf16.mxu0 0
    %208 = vmatpush1.bf16.msra.mxu0 0
    %209 = vmatprep.subr.bf16.mxu0 0
    %210 = vmatpush1.bf16.msra.mxu0 0
    %211 = vmatprep.mubr.bf16.mxu0 0
    %212 = vmatmul.mubr.bf16.gmra.mrb[0].mxu0 %v92
    %v213 = vpop.f32.mrb[0].mxu0
    %v214 = vadd.f32 %v129, %v213
    %v215 = vpop.f32.mrb[0].mxu0
    %v216 = vpop.f32.mrb[0].mxu0
    %v217 = vadd.f32 %v129, %v216
    %v218 = vpop.f32.mrb[0].mxu0
    %219 = vmatprep.mubr.bf16.mxu0 0
    %220 = vmatmul.mubr.bf16.gmra.mrb[0].mxu0 %v93
    %v221 = vpop.f32.mrb[0].mxu0
    %v222 = vadd.f32 %v129, %v221
    %v223 = vpop.f32.mrb[0].mxu0
    %v224 = vpop.f32.mrb[0].mxu0
    %v225 = vadd.f32 %v129, %v224
    %v226 = vpop.f32.mrb[0].mxu0
    %227 = vmatprep.mubr.bf16.mxu0 0
    %228 = vmatmul.mubr.bf16.gmra.mrb[0].mxu0 %v94
    %v229 = vpop.f32.mrb[0].mxu0
    %v230 = vadd.f32 %v129, %v229
    %v231 = vpop.f32.mrb[0].mxu0
    %v232 = vpop.f32.mrb[0].mxu0
    %v233 = vadd.f32 %v129, %v232
    %v234 = vpop.f32.mrb[0].mxu0
    %235 = vmatprep.mubr.bf16.mxu0 0
    %236 = vmatmul.mubr.bf16.gmra.mrb[0].mxu0 %v95
    %v237 = vpop.f32.mrb[0].mxu0
    %v238 = vadd.f32 %v129, %v237
    %v239 = vpop.f32.mrb[0].mxu0
    %v240 = vpop.f32.mrb[0].mxu0
    %v241 = vadd.f32 %v129, %v240
    %v242 = vpop.f32.mrb[0].mxu0
    %243 = vmatprep.mubr.bf16.mxu0 0
    %244 = vmatmul.mubr.bf16.gmra.mrb[0].mxu0 %v96
    %v245 = vpop.f32.mrb[0].mxu0
    %v246 = vadd.f32 %v129, %v245
    %v247 = vpop.f32.mrb[0].mxu0
    %v248 = vpop.f32.mrb[0].mxu0
    %v249 = vadd.f32 %v129, %v248
    %v250 = vpop.f32.mrb[0].mxu0
    %251 = vmatprep.mubr.bf16.mxu0 0
    %252 = vmatmul.mubr.bf16.gmra.mrb[0].mxu0 %v97
    %v253 = vpop.f32.mrb[0].mxu0
    %v254 = vadd.f32 %v129, %v253
    %v255 = vpop.f32.mrb[0].mxu0
    %v256 = vpop.f32.mrb[0].mxu0
    %v257 = vadd.f32 %v129, %v256
    %v258 = vpop.f32.mrb[0].mxu0
    %259 = vmatprep.mubr.bf16.mxu0 0
    %260 = vmatmul.mubr.bf16.gmra.mrb[0].mxu0 %v98
    %v261 = vpop.f32.mrb[0].mxu0
    %v262 = vadd.f32 %v129, %v261
    %v263 = vpop.f32.mrb[0].mxu0
    %v264 = vpop.f32.mrb[0].mxu0
    %v265 = vadd.f32 %v129, %v264
    %v266 = vpop.f32.mrb[0].mxu0
    %267 = vmatprep.mubr.bf16.mxu0 0
    %268 = vmatmul.mubr.bf16.gmra.mrb[0].mxu0 %v99
    %v269 = vpop.f32.mrb[0].mxu0
    %v270 = vadd.f32 %v129, %v269
    %v271 = vpop.f32.mrb[0].mxu0
    %v272 = vpop.f32.mrb[0].mxu0
    %v273 = vadd.f32 %v129, %v272
    %v274 = vpop.f32.mrb[0].mxu0
    %275 = vmatprep.mubr.bf16.mxu0 0
    %276 = vmatmul.mubr.bf16.gmra.mrb[0].mxu0 %v100
    %v277 = vpop.f32.mrb[0].mxu0
    %v278 = vadd.f32 %v129, %v277
    %v279 = vpop.f32.mrb[0].mxu0
    %v280 = vpop.f32.mrb[0].mxu0
    %v281 = vadd.f32 %v129, %v280
    %v282 = vpop.f32.mrb[0].mxu0
    %283 = vmatprep.mubr.bf16.mxu0 0
    %284 = vmatmul.mubr.bf16.gmra.mrb[0].mxu0 %v101
    %v285 = vpop.f32.mrb[0].mxu0
    %v286 = vadd.f32 %v129, %v285
    %v287 = vpop.f32.mrb[0].mxu0
    %v288 = vpop.f32.mrb[0].mxu0
    %v289 = vadd.f32 %v129, %v288
    %v290 = vpop.f32.mrb[0].mxu0
    %291 = vmatprep.mubr.bf16.mxu0 0
    %292 = vmatmul.mubr.bf16.gmra.mrb[0].mxu0 %v102
    %v293 = vpop.f32.mrb[0].mxu0
    %v294 = vadd.f32 %v129, %v293
    %v295 = vpop.f32.mrb[0].mxu0
    %v296 = vpop.f32.mrb[0].mxu0
    %v297 = vadd.f32 %v129, %v296
    %v298 = vpop.f32.mrb[0].mxu0
    %299 = vmatprep.mubr.bf16.mxu0 0
    %300 = vmatmul.mubr.bf16.gmra.mrb[0].mxu0 %v103
    %v301 = vpop.f32.mrb[0].mxu0
    %v302 = vadd.f32 %v129, %v301
    %v303 = vpop.f32.mrb[0].mxu0
    %v304 = vpop.f32.mrb[0].mxu0
    %v305 = vadd.f32 %v129, %v304
    %v306 = vpop.f32.mrb[0].mxu0
    %307 = vmatprep.mubr.bf16.mxu0 0
    %308 = vmatmul.mubr.bf16.gmra.mrb[0].mxu0 %v104
    %v309 = vpop.f32.mrb[0].mxu0
    %v310 = vadd.f32 %v129, %v309
    %v311 = vpop.f32.mrb[0].mxu0
    %v312 = vpop.f32.mrb[0].mxu0
    %v313 = vadd.f32 %v129, %v312
    %v314 = vpop.f32.mrb[0].mxu0
    %315 = vmatprep.mubr.bf16.mxu0 0
    %316 = vmatmul.mubr.bf16.gmra.mrb[0].mxu0 %v105
    %v317 = vpop.f32.mrb[0].mxu0
    %v318 = vadd.f32 %v129, %v317
    %v319 = vpop.f32.mrb[0].mxu0
    %v320 = vpop.f32.mrb[0].mxu0
    %v321 = vadd.f32 %v129, %v320
    %v322 = vpop.f32.mrb[0].mxu0
    %323 = vmatprep.mubr.bf16.mxu0 0
    %324 = vmatmul.mubr.bf16.gmra.mrb[0].mxu0 %v106
    %v325 = vpop.f32.mrb[0].mxu0
    %v326 = vadd.f32 %v129, %v325
    %v327 = vpop.f32.mrb[0].mxu0
    %v328 = vpop.f32.mrb[0].mxu0
    %v329 = vadd.f32 %v129, %v328
    %v330 = vpop.f32.mrb[0].mxu0
    %331 = vmatprep.mubr.bf16.mxu0 0
    %332 = vmatmul.mubr.bf16.gmra.mrb[0].mxu0 %v107
    %v333 = vpop.f32.mrb[0].mxu0
    %v334 = vadd.f32 %v129, %v333
    %v335 = vpop.f32.mrb[0].mxu0
    %v336 = vpop.f32.mrb[0].mxu0
    %v337 = vadd.f32 %v129, %v336
    %v338 = vpop.f32.mrb[0].mxu0
    %339 = vdwg.mxu0
    %v340 = vtanh.pop %v214
    %v341 = vtanh.pop %v217
    %v342 = vtanh.pop %v222
    %v343 = vtanh.pop %v225
    %v344 = vtanh.pop %v230
    %v345 = vtanh.pop %v233
    %v346 = vtanh.pop %v238
    %v347 = vtanh.pop %v241
    %v348 = vtanh.pop %v246
    %v349 = vtanh.pop %v249
    %v350 = vtanh.pop %v254
    %v351 = vtanh.pop %v257
    %v352 = vtanh.pop %v262
    %v353 = vtanh.pop %v265
    %v354 = vtanh.pop %v270
    %v355 = vtanh.pop %v273
    %v356 = vtanh.pop %v278
    %v357 = vtanh.pop %v281
    %v358 = vtanh.pop %v286
    %v359 = vtanh.pop %v289
    %v360 = vtanh.pop %v294
    %v361 = vtanh.pop %v297
    %v362 = vtanh.pop %v302
    %v363 = vtanh.pop %v305
    %v364 = vtanh.pop %v310
    %v365 = vtanh.pop %v313
    %v366 = vtanh.pop %v318
    %v367 = vtanh.pop %v321
    %v368 = vtanh.pop %v326
    %v369 = vtanh.pop %v329
    %v370 = vtanh.pop %v334
    %v371 = vtanh.pop %v337
    %v372 = vpack.c.bf16 %v341, %v340
    %v373 = vpack.c.bf16 %v343, %v342
    %v374 = vpack.c.bf16 %v345, %v344
    %v375 = vpack.c.bf16 %v347, %v346
    %v376 = vpack.c.bf16 %v349, %v348
    %v377 = vpack.c.bf16 %v351, %v350
    %v378 = vpack.c.bf16 %v353, %v352
    %v379 = vpack.c.bf16 %v355, %v354
    %v380 = vpack.c.bf16 %v357, %v356
    %v381 = vpack.c.bf16 %v359, %v358
    %v382 = vpack.c.bf16 %v361, %v360
    %v383 = vpack.c.bf16 %v363, %v362
    %v384 = vpack.c.bf16 %v365, %v364
    %v385 = vpack.c.bf16 %v367, %v366
    %v386 = vpack.c.bf16 %v369, %v368
    %v387 = vpack.c.bf16 %v371, %v370
    %v388 = vld [vmem:[#allocation7] sm:$0xf]
    %v389 = vld [vmem:[#allocation7 + $0x4] sm:$0xf]
    %v390 = vld [vmem:[#allocation7 + $0x8] sm:$0xf]
    %v391 = vld [vmem:[#allocation7 + $0xc] sm:$0xf]
    %v392 = vld [vmem:[#allocation7 + $0x10] sm:$0xf]
    %v393 = vld [vmem:[#allocation7 + $0x14] sm:$0xf]
    %v394 = vld [vmem:[#allocation7 + $0x18] sm:$0xf]
    %v395 = vld [vmem:[#allocation7 + $0x1c] sm:$0xf]
    %v396 = vld [vmem:[#allocation7 + $0x20] sm:$0xf]
    %v397 = vld [vmem:[#allocation7 + $0x24] sm:$0xf]
    %v398 = vld [vmem:[#allocation7 + $0x28] sm:$0xf]
    %v399 = vld [vmem:[#allocation7 + $0x2c] sm:$0xf]
    %v400 = vld [vmem:[#allocation7 + $0x30] sm:$0xf]
    %v401 = vld [vmem:[#allocation7 + $0x34] sm:$0xf]
    %v402 = vld [vmem:[#allocation7 + $0x38] sm:$0xf]
    %v403 = vld [vmem:[#allocation7 + $0x3c] sm:$0xf]
    %v420 = vunpack.c.l.b16 %v388
    %v421 = vunpack.c.l.b16 %v389
    %v422 = vunpack.c.l.b16 %v390
    %v423 = vunpack.c.l.b16 %v391
    %v424 = vunpack.c.l.b16 %v392
    %v425 = vunpack.c.l.b16 %v393
    %v426 = vunpack.c.l.b16 %v394
    %v427 = vunpack.c.l.b16 %v395
    %v428 = vunpack.c.l.b16 %v396
    %v429 = vunpack.c.l.b16 %v397
    %v430 = vunpack.c.l.b16 %v398
    %v431 = vunpack.c.l.b16 %v399
    %v432 = vunpack.c.l.b16 %v400
    %v433 = vunpack.c.l.b16 %v401
    %v434 = vunpack.c.l.b16 %v402
    %v435 = vunpack.c.l.b16 %v403
    %v436 = vpack.c.b16 %v421, %v420
    %v437 = vpack.c.b16 %v423, %v422
    %v438 = vpack.c.b16 %v425, %v424
    %v439 = vpack.c.b16 %v427, %v426
    %v440 = vpack.c.b16 %v429, %v428
    %v441 = vpack.c.b16 %v431, %v430
    %v442 = vpack.c.b16 %v433, %v432
    %v443 = vpack.c.b16 %v435, %v434
    %452 = vmatprep.subr.bf16.mxu0 0
    %453 = vmatpush1.bf16.msra.mxu0 %v436
    %454 = vmatprep.subr.bf16.mxu0 0
    %455 = vmatpush1.bf16.msra.mxu0 %v437
    %456 = vmatprep.subr.bf16.mxu0 0
    %457 = vmatpush1.bf16.msra.mxu0 %v438
    %458 = vmatprep.subr.bf16.mxu0 0
    %459 = vmatpush1.bf16.msra.mxu0 %v439
    %460 = vmatprep.subr.bf16.mxu0 0
    %461 = vmatpush1.bf16.msra.mxu0 %v440
    %462 = vmatprep.subr.bf16.mxu0 0
    %463 = vmatpush1.bf16.msra.mxu0 %v441
    %464 = vmatprep.subr.bf16.mxu0 0
    %465 = vmatpush1.bf16.msra.mxu0 %v442
    %466 = vmatprep.subr.bf16.mxu0 0
    %467 = vmatpush1.bf16.msra.mxu0 %v443
    %468 = vmatprep.subr.bf16.mxu0 0
    %469 = vmatpush1.bf16.msra.mxu0 0
    %470 = vmatprep.subr.bf16.mxu0 0
    %471 = vmatpush1.bf16.msra.mxu0 0
    %472 = vmatprep.subr.bf16.mxu0 0
    %473 = vmatpush1.bf16.msra.mxu0 0
    %474 = vmatprep.subr.bf16.mxu0 0
    %475 = vmatpush1.bf16.msra.mxu0 0
    %476 = vmatprep.subr.bf16.mxu0 0
    %477 = vmatpush1.bf16.msra.mxu0 0
    %478 = vmatprep.subr.bf16.mxu0 0
    %479 = vmatpush1.bf16.msra.mxu0 0
    %480 = vmatprep.subr.bf16.mxu0 0
    %481 = vmatpush1.bf16.msra.mxu0 0
    %482 = vmatprep.subr.bf16.mxu0 0
    %483 = vmatpush1.bf16.msra.mxu0 0
    %484 = vmatprep.mubr.bf16.mxu0 0
    %485 = vmatmul.mubr.bf16.gmra.mrb[0].mxu0 %v372
    %v486 = vpop.f32.mrb[0].mxu0
    %v487 = vadd.f32 0.0, %v486
    %v488 = vpop.f32.mrb[0].mxu0
    %v489 = vpop.f32.mrb[0].mxu0
    %v490 = vadd.f32 0.0, %v489
    %v491 = vpop.f32.mrb[0].mxu0
    %492 = vmatprep.mubr.bf16.mxu0 0
    %493 = vmatmul.mubr.bf16.gmra.mrb[0].mxu0 %v373
    %v494 = vpop.f32.mrb[0].mxu0
    %v495 = vadd.f32 0.0, %v494
    %v496 = vpop.f32.mrb[0].mxu0
    %v497 = vpop.f32.mrb[0].mxu0
    %v498 = vadd.f32 0.0, %v497
    %v499 = vpop.f32.mrb[0].mxu0
    %500 = vmatprep.mubr.bf16.mxu0 0
    %501 = vmatmul.mubr.bf16.gmra.mrb[0].mxu0 %v374
    %v502 = vpop.f32.mrb[0].mxu0
    %v503 = vadd.f32 0.0, %v502
    %v504 = vpop.f32.mrb[0].mxu0
    %v505 = vpop.f32.mrb[0].mxu0
    %v506 = vadd.f32 0.0, %v505
    %v507 = vpop.f32.mrb[0].mxu0
    %508 = vmatprep.mubr.bf16.mxu0 0
    %509 = vmatmul.mubr.bf16.gmra.mrb[0].mxu0 %v375
    %v510 = vpop.f32.mrb[0].mxu0
    %v511 = vadd.f32 0.0, %v510
    %v512 = vpop.f32.mrb[0].mxu0
    %v513 = vpop.f32.mrb[0].mxu0
    %v514 = vadd.f32 0.0, %v513
    %v515 = vpop.f32.mrb[0].mxu0
    %516 = vmatprep.mubr.bf16.mxu0 0
    %517 = vmatmul.mubr.bf16.gmra.mrb[0].mxu0 %v376
    %v518 = vpop.f32.mrb[0].mxu0
    %v519 = vadd.f32 0.0, %v518
    %v520 = vpop.f32.mrb[0].mxu0
    %v521 = vpop.f32.mrb[0].mxu0
    %v522 = vadd.f32 0.0, %v521
    %v523 = vpop.f32.mrb[0].mxu0
    %524 = vmatprep.mubr.bf16.mxu0 0
    %525 = vmatmul.mubr.bf16.gmra.mrb[0].mxu0 %v377
    %v526 = vpop.f32.mrb[0].mxu0
    %v527 = vadd.f32 0.0, %v526
    %v528 = vpop.f32.mrb[0].mxu0
    %v529 = vpop.f32.mrb[0].mxu0
    %v530 = vadd.f32 0.0, %v529
    %v531 = vpop.f32.mrb[0].mxu0
    %532 = vmatprep.mubr.bf16.mxu0 0
    %533 = vmatmul.mubr.bf16.gmra.mrb[0].mxu0 %v378
    %v534 = vpop.f32.mrb[0].mxu0
    %v535 = vadd.f32 0.0, %v534
    %v536 = vpop.f32.mrb[0].mxu0
    %v537 = vpop.f32.mrb[0].mxu0
    %v538 = vadd.f32 0.0, %v537
    %v539 = vpop.f32.mrb[0].mxu0
    %540 = vmatprep.mubr.bf16.mxu0 0
    %541 = vmatmul.mubr.bf16.gmra.mrb[0].mxu0 %v379
    %v542 = vpop.f32.mrb[0].mxu0
    %v543 = vadd.f32 0.0, %v542
    %v544 = vpop.f32.mrb[0].mxu0
    %v545 = vpop.f32.mrb[0].mxu0
    %v546 = vadd.f32 0.0, %v545
    %v547 = vpop.f32.mrb[0].mxu0
    %548 = vmatprep.mubr.bf16.mxu0 0
    %549 = vmatmul.mubr.bf16.gmra.mrb[0].mxu0 %v380
    %v550 = vpop.f32.mrb[0].mxu0
    %v551 = vadd.f32 0.0, %v550
    %v552 = vpop.f32.mrb[0].mxu0
    %v553 = vpop.f32.mrb[0].mxu0
    %v554 = vadd.f32 0.0, %v553
    %v555 = vpop.f32.mrb[0].mxu0
    %556 = vmatprep.mubr.bf16.mxu0 0
    %557 = vmatmul.mubr.bf16.gmra.mrb[0].mxu0 %v381
    %v558 = vpop.f32.mrb[0].mxu0
    %v559 = vadd.f32 0.0, %v558
    %v560 = vpop.f32.mrb[0].mxu0
    %v561 = vpop.f32.mrb[0].mxu0
    %v562 = vadd.f32 0.0, %v561
    %v563 = vpop.f32.mrb[0].mxu0
    %564 = vmatprep.mubr.bf16.mxu0 0
    %565 = vmatmul.mubr.bf16.gmra.mrb[0].mxu0 %v382
    %v566 = vpop.f32.mrb[0].mxu0
    %v567 = vadd.f32 0.0, %v566
    %v568 = vpop.f32.mrb[0].mxu0
    %v569 = vpop.f32.mrb[0].mxu0
    %v570 = vadd.f32 0.0, %v569
    %v571 = vpop.f32.mrb[0].mxu0
    %572 = vmatprep.mubr.bf16.mxu0 0
    %573 = vmatmul.mubr.bf16.gmra.mrb[0].mxu0 %v383
    %v574 = vpop.f32.mrb[0].mxu0
    %v575 = vadd.f32 0.0, %v574
    %v576 = vpop.f32.mrb[0].mxu0
    %v577 = vpop.f32.mrb[0].mxu0
    %v578 = vadd.f32 0.0, %v577
    %v579 = vpop.f32.mrb[0].mxu0
    %580 = vmatprep.mubr.bf16.mxu0 0
    %581 = vmatmul.mubr.bf16.gmra.mrb[0].mxu0 %v384
    %v582 = vpop.f32.mrb[0].mxu0
    %v583 = vadd.f32 0.0, %v582
    %v584 = vpop.f32.mrb[0].mxu0
    %v585 = vpop.f32.mrb[0].mxu0
    %v586 = vadd.f32 0.0, %v585
    %v587 = vpop.f32.mrb[0].mxu0
    %588 = vmatprep.mubr.bf16.mxu0 0
    %589 = vmatmul.mubr.bf16.gmra.mrb[0].mxu0 %v385
    %v590 = vpop.f32.mrb[0].mxu0
    %v591 = vadd.f32 0.0, %v590
    %v592 = vpop.f32.mrb[0].mxu0
    %v593 = vpop.f32.mrb[0].mxu0
    %v594 = vadd.f32 0.0, %v593
    %v595 = vpop.f32.mrb[0].mxu0
    %596 = vmatprep.mubr.bf16.mxu0 0
    %597 = vmatmul.mubr.bf16.gmra.mrb[0].mxu0 %v386
    %v598 = vpop.f32.mrb[0].mxu0
    %v599 = vadd.f32 0.0, %v598
    %v600 = vpop.f32.mrb[0].mxu0
    %v601 = vpop.f32.mrb[0].mxu0
    %v602 = vadd.f32 0.0, %v601
    %v603 = vpop.f32.mrb[0].mxu0
    %604 = vmatprep.mubr.bf16.mxu0 0
    %605 = vmatmul.mubr.bf16.gmra.mrb[0].mxu0 %v387
    %v606 = vpop.f32.mrb[0].mxu0
    %v607 = vadd.f32 0.0, %v606
    %v608 = vpop.f32.mrb[0].mxu0
    %v609 = vpop.f32.mrb[0].mxu0
    %v610 = vadd.f32 0.0, %v609
    %v611 = vpop.f32.mrb[0].mxu0
    %612 = vdwg.mxu0
    %v613 = vpack.c.bf16 %v490, %v487
    %v614 = vpack.c.bf16 %v498, %v495
    %v615 = vpack.c.bf16 %v506, %v503
    %v616 = vpack.c.bf16 %v514, %v511
    %v617 = vpack.c.bf16 %v522, %v519
    %v618 = vpack.c.bf16 %v530, %v527
    %v619 = vpack.c.bf16 %v538, %v535
    %v620 = vpack.c.bf16 %v546, %v543
    %v621 = vpack.c.bf16 %v554, %v551
    %v622 = vpack.c.bf16 %v562, %v559
    %v623 = vpack.c.bf16 %v570, %v567
    %v624 = vpack.c.bf16 %v578, %v575
    %v625 = vpack.c.bf16 %v586, %v583
    %v626 = vpack.c.bf16 %v594, %v591
    %v627 = vpack.c.bf16 %v602, %v599
    %v628 = vpack.c.bf16 %v610, %v607
    %v645 = vunpack.c.l.b16 %v613
    %v646 = vunpack.c.h.b16 %v613
    %v647 = vunpack.c.l.b16 %v614
    %v648 = vunpack.c.h.b16 %v614
    %v649 = vunpack.c.l.b16 %v615
    %v650 = vunpack.c.h.b16 %v615
    %v651 = vunpack.c.l.b16 %v616
    %v652 = vunpack.c.h.b16 %v616
    %v653 = vunpack.c.l.b16 %v617
    %v654 = vunpack.c.h.b16 %v617
    %v655 = vunpack.c.l.b16 %v618
    %v656 = vunpack.c.h.b16 %v618
    %v657 = vunpack.c.l.b16 %v619
    %v658 = vunpack.c.h.b16 %v619
    %v659 = vunpack.c.l.b16 %v620
    %v660 = vunpack.c.h.b16 %v620
    %v661 = vunpack.c.l.b16 %v621
    %v662 = vunpack.c.h.b16 %v621
    %v663 = vunpack.c.l.b16 %v622
    %v664 = vunpack.c.h.b16 %v622
    %v665 = vunpack.c.l.b16 %v623
    %v666 = vunpack.c.h.b16 %v623
    %v667 = vunpack.c.l.b16 %v624
    %v668 = vunpack.c.h.b16 %v624
    %v669 = vunpack.c.l.b16 %v625
    %v670 = vunpack.c.h.b16 %v625
    %v671 = vunpack.c.l.b16 %v626
    %v672 = vunpack.c.h.b16 %v626
    %v673 = vunpack.c.l.b16 %v627
    %v674 = vunpack.c.h.b16 %v627
    %v675 = vunpack.c.l.b16 %v628
    %v676 = vunpack.c.h.b16 %v628
    %v677 = vpack.c.b16 %v645, %v645
    %v678 = vpack.c.b16 %v646, %v646
    %v679 = vpack.c.b16 %v647, %v647
    %v680 = vpack.c.b16 %v648, %v648
    %v681 = vpack.c.b16 %v649, %v649
    %v682 = vpack.c.b16 %v650, %v650
    %v683 = vpack.c.b16 %v651, %v651
    %v684 = vpack.c.b16 %v652, %v652
    %v685 = vpack.c.b16 %v653, %v653
    %v686 = vpack.c.b16 %v654, %v654
    %v687 = vpack.c.b16 %v655, %v655
    %v688 = vpack.c.b16 %v656, %v656
    %v689 = vpack.c.b16 %v657, %v657
    %v690 = vpack.c.b16 %v658, %v658
    %v691 = vpack.c.b16 %v659, %v659
    %v692 = vpack.c.b16 %v660, %v660
    %v693 = vpack.c.b16 %v661, %v661
    %v694 = vpack.c.b16 %v662, %v662
    %v695 = vpack.c.b16 %v663, %v663
    %v696 = vpack.c.b16 %v664, %v664
    %v697 = vpack.c.b16 %v665, %v665
    %v698 = vpack.c.b16 %v666, %v666
    %v699 = vpack.c.b16 %v667, %v667
    %v700 = vpack.c.b16 %v668, %v668
    %v701 = vpack.c.b16 %v669, %v669
    %v702 = vpack.c.b16 %v670, %v670
    %v703 = vpack.c.b16 %v671, %v671
    %v704 = vpack.c.b16 %v672, %v672
    %v705 = vpack.c.b16 %v673, %v673
    %v706 = vpack.c.b16 %v674, %v674
    %v707 = vpack.c.b16 %v675, %v675
    %v708 = vpack.c.b16 %v676, %v676
    %741 = vst [vmem:[#allocation8] sm:$0xf] %v677
    %742 = vst [vmem:[#allocation8 + $0x4] sm:$0xf] %v678
    %743 = vst [vmem:[#allocation8 + $0x8] sm:$0xf] %v679
    %744 = vst [vmem:[#allocation8 + $0xc] sm:$0xf] %v680
    %745 = vst [vmem:[#allocation8 + $0x10] sm:$0xf] %v681
    %746 = vst [vmem:[#allocation8 + $0x14] sm:$0xf] %v682
    %747 = vst [vmem:[#allocation8 + $0x18] sm:$0xf] %v683
    %748 = vst [vmem:[#allocation8 + $0x1c] sm:$0xf] %v684
    %749 = vst [vmem:[#allocation8 + $0x20] sm:$0xf] %v685
    %750 = vst [vmem:[#allocation8 + $0x24] sm:$0xf] %v686
    %751 = vst [vmem:[#allocation8 + $0x28] sm:$0xf] %v687
    %752 = vst [vmem:[#allocation8 + $0x2c] sm:$0xf] %v688
    %753 = vst [vmem:[#allocation8 + $0x30] sm:$0xf] %v689
    %754 = vst [vmem:[#allocation8 + $0x34] sm:$0xf] %v690
    %755 = vst [vmem:[#allocation8 + $0x38] sm:$0xf] %v691
    %756 = vst [vmem:[#allocation8 + $0x3c] sm:$0xf] %v692
    %757 = vst [vmem:[#allocation8 + $0x40] sm:$0xf] %v693
    %758 = vst [vmem:[#allocation8 + $0x44] sm:$0xf] %v694
    %759 = vst [vmem:[#allocation8 + $0x48] sm:$0xf] %v695
    %760 = vst [vmem:[#allocation8 + $0x4c] sm:$0xf] %v696
    %761 = vst [vmem:[#allocation8 + $0x50] sm:$0xf] %v697
    %762 = vst [vmem:[#allocation8 + $0x54] sm:$0xf] %v698
    %763 = vst [vmem:[#allocation8 + $0x58] sm:$0xf] %v699
    %764 = vst [vmem:[#allocation8 + $0x5c] sm:$0xf] %v700
    %765 = vst [vmem:[#allocation8 + $0x60] sm:$0xf] %v701
    %766 = vst [vmem:[#allocation8 + $0x64] sm:$0xf] %v702
    %767 = vst [vmem:[#allocation8 + $0x68] sm:$0xf] %v703
    %768 = vst [vmem:[#allocation8 + $0x6c] sm:$0xf] %v704
    %769 = vst [vmem:[#allocation8 + $0x70] sm:$0xf] %v705
    %770 = vst [vmem:[#allocation8 + $0x74] sm:$0xf] %v706
    %771 = vst [vmem:[#allocation8 + $0x78] sm:$0xf] %v707
    %772 = vst [vmem:[#allocation8 + $0x7c] sm:$0xf] %v708
    // Predicated region
    $region30: #{tpu_custom_call.1} parent=1 // pred_check
      _
    $region31: #{tpu_custom_call.1} parent=1 // pred_check_branch
      %774 = sbr.rel (0) target = $region33
    $region32: #{tpu_custom_call.1} parent=1 // pred_region
      %s776 = ssub.s32 2048, 2048
      %777 = vsyncadd [#allocation4], %s776
      %s778 = sshll.u32 [#allocation8], 4
      %s779 = int_to_ptr.vmem [resolvable:$true] %s778
      %784 = dma.vmem_to_hbm [thread:$0]  %s779, 2048, %s4, [#allocation4], 64, 64, 4
    $region33: #{tpu_custom_call.1} parent=1 // pred_fallthru
      _
    // Predicated region
    $region34: #{tpu_custom_call.1} parent=1 // pred_check
      _
    $region35: #{tpu_custom_call.1} parent=1 // pred_check_branch
      %786 = sbr.rel (0) target = $region37
    $region36: #{tpu_custom_call.1} parent=1 // pred_region
      %787 = dma.done [#allocation4], 2048
    $region37: #{tpu_custom_call.1} parent=1 // pred_fallthru
      _
    %788 = vsyncpa [#allocation3], 1
    %789 = vsyncpa [#allocation6], 1
    %790 = vsyncpa [#allocation4], 1

</llo_original>
